<compile_context>
chip_gen: v6e
topology: v6e:2x2x1
jax: 0.10.0
libtpu: 0.0.40
codegen_flags: <defaults>
</compile_context>

<pallas_src>
import jax
import jax.numpy as jnp
from jax.experimental import pallas as pl
from jax.experimental.pallas import tpu as pltpu

LRELU_SLOPE = 0.2


# ----------------------------------------------------------------------------
# Fused ToRGB kernel: style linear + modulated 1x1 conv + bias + LeakyReLU
# ----------------------------------------------------------------------------
def _to_rgb_kernel(w_ref, swt_ref, sb_ref, cw_ref, bias_ref, x_ref, o_ref):
    """One (sample b, spatial tile t) grid point.

    w_ref    : [1, 1, W_DIM]  latent w for sample b
    swt_ref  : [W_DIM, Cin]   pre-scaled, transposed EqualizedLinear weight
    sb_ref   : [1, Cin]       style bias (init 1.0)
    cw_ref   : [3, Cin]       pre-scaled 1x1 conv weight (out x in)
    bias_ref : [3, 1]         rgb bias as a column (broadcasts over lanes)
    x_ref    : [1, Cin, T]    input activations, spatial tile on the lane axis
    o_ref    : [1, 3, T]      rgb output tile, lane-dense
    """
    # Per-sample style: s = w @ (c * W_style)^T + b_style             -> [1, Cin]
    s = jnp.dot(w_ref[0], swt_ref[...],
                preferred_element_type=jnp.float32) + sb_ref[...]
    # Weight modulation (ToRGB uses demodulate=False)                 -> [3, Cin]
    wmod = cw_ref[...] * s
    # 1x1 conv as a matmul: out channels on sublanes, spatial on lanes -> [3, T]
    y = jnp.dot(wmod, x_ref[0], preferred_element_type=jnp.float32)
    y = y + bias_ref[...]                           # broadcast bias over lanes
    o_ref[0] = jnp.where(y >= 0.0, y, LRELU_SLOPE * y)   # LeakyReLU(0.2)


def _pick_spatial_tile(hw, max_tile=2048):
    """Largest lane-dense (multiple-of-128) tile that divides hw, capped."""
    if hw % 128 != 0 or hw <= max_tile:
        return hw
    t = (max_tile // 128) * 128
    while t >= 128:
        if hw % t == 0:
            return t
        t -= 128
    return hw


def to_rgb_forward(params, x, w_lat):
    """ToRGB.forward.  x: [B, Cin, H, W] (NCHW), w_lat: [B, W_DIM] -> [B, 3, H, W]."""
    B, cin, H, W = x.shape
    hw = H * W
    wdim = w_lat.shape[1]

    x_flat = x.reshape(B, cin, hw)          # free reshape (contiguous NCHW)
    w3 = w_lat.reshape(B, 1, wdim)          # keep last-two block dims == full dims

    T = _pick_spatial_tile(hw)
    nt = hw // T

    rgb_flat = pl.pallas_call(
        _to_rgb_kernel,
        out_shape=jax.ShapeDtypeStruct((B, 3, hw), jnp.float32),
        grid=(B, nt),
        in_specs=[
            pl.BlockSpec((1, 1, wdim), lambda b, t: (b, 0, 0)),   # latent w
            pl.BlockSpec((wdim, cin), lambda b, t: (0, 0)),       # style weight
            pl.BlockSpec((1, cin), lambda b, t: (0, 0)),          # style bias
            pl.BlockSpec((3, cin), lambda b, t: (0, 0)),          # conv weight
            pl.BlockSpec((3, 1), lambda b, t: (0, 0)),            # rgb bias
            pl.BlockSpec((1, cin, T), lambda b, t: (b, 0, t)),    # activations
        ],
        out_specs=pl.BlockSpec((1, 3, T), lambda b, t: (b, 0, t)),
        compiler_params=pltpu.CompilerParams(
            dimension_semantics=("parallel", "parallel")),
    )(w3, params["style_wt"], params["style_b"],
      params["conv_w"], params["rgb_bias"], x_flat)

    return rgb_flat.reshape(B, 3, H, W)     # free reshape back to NCHW


# ----------------------------------------------------------------------------
# Parameter init matching PyTorch ToRGB.__init__ (EqualizedWeight scale folded in)
# ----------------------------------------------------------------------------
def init_to_rgb(key, w_dim, features):
    k1, k2 = jax.random.split(key)
    # EqualizedLinear(W_DIM, features, bias=1.0): weight [features, w_dim]
    w_style = jax.random.normal(k1, (features, w_dim), jnp.float32)
    c_style = 1.0 / jnp.sqrt(jnp.float32(w_dim))
    style_wt = (w_style * c_style).T                      # [w_dim, features]
    style_b = jnp.ones((1, features), jnp.float32)        # bias = 1.0
    # Conv2dWeightModulate(features, 3, kernel_size=1, demodulate=False)
    w_conv = jax.random.normal(k2, (3, features, 1, 1), jnp.float32)
    c_conv = 1.0 / jnp.sqrt(jnp.float32(features))
    conv_w = (w_conv * c_conv).reshape(3, features)       # [3, features]
    rgb_bias = jnp.zeros((3, 1), jnp.float32)             # nn.Parameter(zeros(3))
    return {"style_wt": style_wt, "style_b": style_b,
            "conv_w": conv_w, "rgb_bias": rgb_bias}


# ----------------------------------------------------------------------------
# Pure-JAX reference (mirrors the PyTorch module) for a correctness check
# ----------------------------------------------------------------------------
def to_rgb_reference(params, x, w_lat):
    s = jnp.dot(w_lat, params["style_wt"],
                precision=jax.lax.Precision.HIGHEST) + params["style_b"]   # [B, C]
    wmod = params["conv_w"][None] * s[:, None, :]                          # [B, 3, C]
    y = jnp.einsum("boc,bchw->bohw", wmod, x,
                   precision=jax.lax.Precision.HIGHEST)
    y = y + params["rgb_bias"].reshape(1, 3, 1, 1)
    return jnp.where(y >= 0, y, LRELU_SLOPE * y)


if __name__ == "__main__":
    W_DIM, FEATURES, H, W, B = 32, 16, 16, 16, 2
    key = jax.random.PRNGKey(0)
    kp, kx, kw = jax.random.split(key, 3)

    params = init_to_rgb(kp, W_DIM, FEATURES)
    x = jax.random.normal(kx, (B, FEATURES, H, W), jnp.float32)
    w_lat = jax.random.normal(kw, (B, W_DIM), jnp.float32)

    rgb = jax.jit(to_rgb_forward)(params, x, w_lat)
    jax.block_until_ready(rgb)
    assert rgb.shape == (B, 3, H, W)

    ref = to_rgb_reference(params, x, w_lat)
    assert jnp.allclose(rgb, ref, atol=1e-2, rtol=1e-2), \
        f"max abs err {float(jnp.max(jnp.abs(rgb - ref)))}"
    print("KERNEL_OK")
</pallas_src>

<mosaic_0001>
module attributes {stable_mosaic.version = 11 : i64} {
  func.func @_to_rgb_kernel(%arg0: i32, %arg1: i32, %arg2: memref<1x1x32xf32, #tpu.memory_space<vmem>>, %arg3: memref<32x16xf32, #tpu.memory_space<vmem>>, %arg4: memref<1x16xf32, #tpu.memory_space<vmem>>, %arg5: memref<3x16xf32, #tpu.memory_space<vmem>>, %arg6: memref<3x1xf32, #tpu.memory_space<vmem>>, %arg7: memref<1x16x256xf32, #tpu.memory_space<vmem>>, %arg8: memref<1x3x256xf32, #tpu.memory_space<vmem>>) attributes {dimension_semantics = [#tpu.dimension_semantics<parallel>, #tpu.dimension_semantics<parallel>], iteration_bounds = array<i64: 2, 1>, scalar_prefetch = 0 : i64, scratch_operands = 0 : i64, tpu.core_type = #tpu.core_type<tc>, window_params = [{transform_indices = @transform_0, window_bounds = array<i64: 1, 1, 32>}, {pipeline_mode = #tpu.pipeline_mode<synchronous>, transform_indices = @transform_1, window_bounds = array<i64: 32, 16>}, {pipeline_mode = #tpu.pipeline_mode<synchronous>, transform_indices = @transform_2, window_bounds = array<i64: 1, 16>}, {pipeline_mode = #tpu.pipeline_mode<synchronous>, transform_indices = @transform_3, window_bounds = array<i64: 3, 16>}, {pipeline_mode = #tpu.pipeline_mode<synchronous>, transform_indices = @transform_4, window_bounds = array<i64: 3, 1>}, {transform_indices = @transform_5, window_bounds = array<i64: 1, 16, 256>}, {transform_indices = @transform_6, window_bounds = array<i64: 1, 3, 256>}]} {
    %c0 = arith.constant 0 : index
    %c0_0 = arith.constant 0 : index
    %c0_1 = arith.constant 0 : index
    %0 = vector.load %arg2[%c0, %c0_0, %c0_1] : memref<1x1x32xf32, #tpu.memory_space<vmem>>, vector<1x1x32xf32>
    %1 = vector.shape_cast %0 : vector<1x1x32xf32> to vector<1x32xf32>
    %c0_2 = arith.constant 0 : index
    %c0_3 = arith.constant 0 : index
    %2 = vector.load %arg3[%c0_2, %c0_3] : memref<32x16xf32, #tpu.memory_space<vmem>>, vector<32x16xf32>
    %cst = arith.constant dense<0.000000e+00> : vector<1x16xf32>
    %3 = tpu.matmul %1, %2, %cst {dimension_numbers = #tpu.dot_dimension_numbers<[1], [0], [0], [1], [0, 0, 1, 1], [], []>} : vector<1x32xf32>, vector<32x16xf32>, vector<1x16xf32> -> vector<1x16xf32>
    %c0_4 = arith.constant 0 : index
    %c0_5 = arith.constant 0 : index
    %4 = vector.load %arg4[%c0_4, %c0_5] : memref<1x16xf32, #tpu.memory_space<vmem>>, vector<1x16xf32>
    %5 = arith.addf %3, %4 : vector<1x16xf32>
    %c0_6 = arith.constant 0 : index
    %c0_7 = arith.constant 0 : index
    %6 = vector.load %arg5[%c0_6, %c0_7] : memref<3x16xf32, #tpu.memory_space<vmem>>, vector<3x16xf32>
    %7 = vector.broadcast %5 : vector<1x16xf32> to vector<3x16xf32>
    %8 = arith.mulf %6, %7 : vector<3x16xf32>
    %c0_8 = arith.constant 0 : index
    %c0_9 = arith.constant 0 : index
    %c0_10 = arith.constant 0 : index
    %9 = vector.load %arg7[%c0_8, %c0_9, %c0_10] : memref<1x16x256xf32, #tpu.memory_space<vmem>>, vector<1x16x256xf32>
    %10 = vector.shape_cast %9 : vector<1x16x256xf32> to vector<16x256xf32>
    %cst_11 = arith.constant dense<0.000000e+00> : vector<3x256xf32>
    %11 = tpu.matmul %8, %10, %cst_11 {dimension_numbers = #tpu.dot_dimension_numbers<[1], [0], [0], [1], [0, 0, 1, 1], [], []>} : vector<3x16xf32>, vector<16x256xf32>, vector<3x256xf32> -> vector<3x256xf32>
    %c0_12 = arith.constant 0 : index
    %c0_13 = arith.constant 0 : index
    %12 = vector.load %arg6[%c0_12, %c0_13] : memref<3x1xf32, #tpu.memory_space<vmem>>, vector<3x1xf32>
    %13 = vector.broadcast %12 : vector<3x1xf32> to vector<3x256xf32>
    %14 = arith.addf %11, %13 : vector<3x256xf32>
    %cst_14 = arith.constant 0.000000e+00 : f32
    %15 = vector.broadcast %cst_14 : f32 to vector<3x256xf32>
    %16 = arith.cmpf oge, %14, %15 : vector<3x256xf32>
    %cst_15 = arith.constant 2.000000e-01 : f32
    %17 = vector.broadcast %cst_15 : f32 to vector<3x256xf32>
    %18 = arith.mulf %17, %14 : vector<3x256xf32>
    %19 = arith.select %16, %14, %18 : vector<3x256xi1>, vector<3x256xf32>
    %c0_16 = arith.constant 0 : index
    %c0_17 = arith.constant 0 : index
    %c0_18 = arith.constant 0 : index
    %20 = vector.load %arg8[%c0_16, %c0_17, %c0_18] : memref<1x3x256xf32, #tpu.memory_space<vmem>>, vector<1x3x256xf32>
    %21 = vector.shape_cast %20 : vector<1x3x256xf32> to vector<3x256xf32>
    %22 = vector.shape_cast %19 : vector<3x256xf32> to vector<1x3x256xf32>
    tpu.vector_store %arg8[%c0_16, %c0_17, %c0_18], %22 {strides = array<i32>} : memref<1x3x256xf32, #tpu.memory_space<vmem>>, vector<1x3x256xf32>,
    return
  }
  func.func @transform_0(%arg0: i32, %arg1: i32) -> (i32, i32, i32) {
    %c0_i32 = arith.constant 0 : i32
    %c0_i32_0 = arith.constant 0 : i32
    %c0_i32_1 = arith.constant 0 : i32
    return %arg0, %c0_i32, %c0_i32_0 : i32, i32, i32
  }
  func.func @transform_1(%arg0: i32, %arg1: i32) -> (i32, i32) {
    %c0_i32 = arith.constant 0 : i32
    %c0_i32_0 = arith.constant 0 : i32
    %c0_i32_1 = arith.constant 0 : i32
    return %c0_i32, %c0_i32_0 : i32, i32
  }
  func.func @transform_2(%arg0: i32, %arg1: i32) -> (i32, i32) {
    %c0_i32 = arith.constant 0 : i32
    %c0_i32_0 = arith.constant 0 : i32
    %c0_i32_1 = arith.constant 0 : i32
    return %c0_i32, %c0_i32_0 : i32, i32
  }
  func.func @transform_3(%arg0: i32, %arg1: i32) -> (i32, i32) {
    %c0_i32 = arith.constant 0 : i32
    %c0_i32_0 = arith.constant 0 : i32
    %c0_i32_1 = arith.constant 0 : i32
    return %c0_i32, %c0_i32_0 : i32, i32
  }
  func.func @transform_4(%arg0: i32, %arg1: i32) -> (i32, i32) {
    %c0_i32 = arith.constant 0 : i32
    %c0_i32_0 = arith.constant 0 : i32
    %c0_i32_1 = arith.constant 0 : i32
    return %c0_i32, %c0_i32_0 : i32, i32
  }
  func.func @transform_5(%arg0: i32, %arg1: i32) -> (i32, i32, i32) {
    %c0_i32 = arith.constant 0 : i32
    %c0_i32_0 = arith.constant 0 : i32
    return %arg0, %c0_i32, %arg1 : i32, i32, i32
  }
  func.func @transform_6(%arg0: i32, %arg1: i32) -> (i32, i32, i32) {
    %c0_i32 = arith.constant 0 : i32
    %c0_i32_0 = arith.constant 0 : i32
    return %arg0, %c0_i32, %arg1 : i32, i32, i32
  }
}

</mosaic_0001>

<llo_original>
// kernel: to_rgb_forward.1
$region0: #{to_rgb_forward.1}
  #allocation0 [shape = 'u32[]', space=smem, size = 0x4, offset = 0x4, fixed_abs, tag = 'smem constant byte address 0x4 - core index']
  #allocation1 [shape = 'u32[144,128]{1,0:T(1,128)}', space=vmem, size = 0x12000, scoped, tag = 'internal scratch']
  %s0 = inlined_call_operand.vmem [shape: f32[2,1,32], index: 0, kind: input, shape index: {}]
  %s1 = inlined_call_operand.vmem [shape: f32[32,16], index: 1, kind: input, shape index: {}]
  %s2 = inlined_call_operand.vmem [shape: f32[1,16], index: 2, kind: input, shape index: {}]
  %s3 = inlined_call_operand.vmem [shape: f32[3,16], index: 3, kind: input, shape index: {}]
  %s4 = inlined_call_operand.vmem [shape: f32[3,1], index: 4, kind: input, shape index: {}]
  %s5 = inlined_call_operand.vmem [shape: f32[2,16,256], index: 5, kind: input, shape index: {}]
  %s6 = inlined_call_operand.vmem [shape: f32[2,3,256], index: 6, kind: output, shape index: {}]
  %s7 = sld [smem:[#allocation0]]
  $region57: #{to_rgb_forward.1} parent=0
    _
  %s9 = ssub.s32 1, %s7
  %s10 = scalar_select 0, %s9, %s7
  loop: start=0, step=1, limit=4
  $region2: #{to_rgb_forward.1} parent=0 // loop_pre_header
    _
  $region3: #{to_rgb_forward.1} parent=0 // loop_header
    %s12 = sphi 0, %s16
    %p13 = scmp.ge.s32.totalorder %s12, 4
    %s19 = sphi 0, %s31
    %s20 = sphi 0, %s27
    %s21 = sphi 0, %s19
    %s22 = sphi 0, %s20
    %s23 = sphi 0, %s21
    %s24 = sphi 0, %s22
    %s34 = sphi 0, %s36
    %s37 = sphi 0, %s34
    %s38 = sphi 0, %s37
    %s54 = sphi 0, %s38
    %s58 = sphi 0, %s58
    %s60 = sphi 0, %s58
    %s61 = sphi 0, %s60
    %s75 = sphi 0, %s61
    %s79 = sphi 0, %s79
    %s81 = sphi 0, %s79
    %s82 = sphi 0, %s81
    %s96 = sphi 0, %s82
    %s100 = sphi 0, %s100
    %s102 = sphi 0, %s100
    %s103 = sphi 0, %s102
    %s117 = sphi 0, %s103
    %s121 = sphi 0, %s121
    %s123 = sphi 0, %s121
    %s124 = sphi 0, %s123
    %s138 = sphi 0, %s124
    %s146 = sphi 0, %s148
    %s149 = sphi 0, %s146
    %s150 = sphi 0, %s149
    %s166 = sphi 0, %s150
    %s174 = sphi 0, %s176
    %s177 = sphi 0, %s174
    %s178 = sphi 0, %s177
    %s194 = sphi 0, %s178
  $region4: #{to_rgb_forward.1} parent=0 // loop_header_branch
    %15 = sbr.rel (%p13) target = $region8
  $region5: #{to_rgb_forward.1} parent=0 // loop_body
    %s17 = ssub.s32 %s12, 1
    %s18 = ssub.s32 %s12, 2
    %s25 = sadd.s32 1, %s20
    %p26 = scmp.ge.s32.totalorder %s25, 1
    %s27 = scalar_select %p26, 0, %s25
    %s28 = sadd.s32 1, %s19
    %s29 = scalar_select %p26, %s28, %s19
    %p30 = scmp.ge.s32.totalorder %s29, 2
    %s31 = scalar_select %p30, 0, %s29
    %s32 = ssub.s32 %s19, %s31
    %p33 = scmp.eq.s32.totalorder %s32, 0
    %s35 = sadd.s32 %s34, 1
    %s36 = scalar_select %p33, %s34, %s35
    %p39 = pneg %p33
    %p40 = scmp.eq.s32.totalorder %s12, 1
    %p41 = por %p39, %p40
    %p42 = scmp.ne.s32.totalorder %s34, %s37
    %p43 = scmp.eq.s32.totalorder %s12, 0
    %p44 = por %p42, %p43
    %p45 = scmp.ne.s32.totalorder %s34, %s37
    %p46 = scmp.eq.s32.totalorder %s17, 1
    %p47 = por %p45, %p46
    %p48 = scmp.ne.s32.totalorder %s37, %s38
    %p49 = scmp.eq.s32.totalorder %s17, 0
    %p50 = por %p48, %p49
    %p51 = scmp.ne.s32.totalorder %s37, %s38
    %p52 = scmp.eq.s32.totalorder %s18, 1
    %p53 = por %p51, %p52
    %p55 = scmp.ne.s32.totalorder %s38, %s54
    %p56 = scmp.eq.s32.totalorder %s18, 0
    %p57 = por %p55, %p56
    %s59 = sadd.s32 %s58, 1
    %p62 = scmp.eq.s32.totalorder %s12, 1
    %p63 = scmp.ne.s32.totalorder %s58, %s60
    %p64 = scmp.eq.s32.totalorder %s12, 0
    %p65 = por %p63, %p64
    %p66 = scmp.ne.s32.totalorder %s58, %s60
    %p67 = scmp.eq.s32.totalorder %s17, 1
    %p68 = por %p66, %p67
    %p69 = scmp.ne.s32.totalorder %s60, %s61
    %p70 = scmp.eq.s32.totalorder %s17, 0
    %p71 = por %p69, %p70
    %p72 = scmp.ne.s32.totalorder %s60, %s61
    %p73 = scmp.eq.s32.totalorder %s18, 1
    %p74 = por %p72, %p73
    %p76 = scmp.ne.s32.totalorder %s61, %s75
    %p77 = scmp.eq.s32.totalorder %s18, 0
    %p78 = por %p76, %p77
    %s80 = sadd.s32 %s79, 1
    %p83 = scmp.eq.s32.totalorder %s12, 1
    %p84 = scmp.ne.s32.totalorder %s79, %s81
    %p85 = scmp.eq.s32.totalorder %s12, 0
    %p86 = por %p84, %p85
    %p87 = scmp.ne.s32.totalorder %s79, %s81
    %p88 = scmp.eq.s32.totalorder %s17, 1
    %p89 = por %p87, %p88
    %p90 = scmp.ne.s32.totalorder %s81, %s82
    %p91 = scmp.eq.s32.totalorder %s17, 0
    %p92 = por %p90, %p91
    %p93 = scmp.ne.s32.totalorder %s81, %s82
    %p94 = scmp.eq.s32.totalorder %s18, 1
    %p95 = por %p93, %p94
    %p97 = scmp.ne.s32.totalorder %s82, %s96
    %p98 = scmp.eq.s32.totalorder %s18, 0
    %p99 = por %p97, %p98
    %s101 = sadd.s32 %s100, 1
    %p104 = scmp.eq.s32.totalorder %s12, 1
    %p105 = scmp.ne.s32.totalorder %s100, %s102
    %p106 = scmp.eq.s32.totalorder %s12, 0
    %p107 = por %p105, %p106
    %p108 = scmp.ne.s32.totalorder %s100, %s102
    %p109 = scmp.eq.s32.totalorder %s17, 1
    %p110 = por %p108, %p109
    %p111 = scmp.ne.s32.totalorder %s102, %s103
    %p112 = scmp.eq.s32.totalorder %s17, 0
    %p113 = por %p111, %p112
    %p114 = scmp.ne.s32.totalorder %s102, %s103
    %p115 = scmp.eq.s32.totalorder %s18, 1
    %p116 = por %p114, %p115
    %p118 = scmp.ne.s32.totalorder %s103, %s117
    %p119 = scmp.eq.s32.totalorder %s18, 0
    %p120 = por %p118, %p119
    %s122 = sadd.s32 %s121, 1
    %p125 = scmp.eq.s32.totalorder %s12, 1
    %p126 = scmp.ne.s32.totalorder %s121, %s123
    %p127 = scmp.eq.s32.totalorder %s12, 0
    %p128 = por %p126, %p127
    %p129 = scmp.ne.s32.totalorder %s121, %s123
    %p130 = scmp.eq.s32.totalorder %s17, 1
    %p131 = por %p129, %p130
    %p132 = scmp.ne.s32.totalorder %s123, %s124
    %p133 = scmp.eq.s32.totalorder %s17, 0
    %p134 = por %p132, %p133
    %p135 = scmp.ne.s32.totalorder %s123, %s124
    %p136 = scmp.eq.s32.totalorder %s18, 1
    %p137 = por %p135, %p136
    %p139 = scmp.ne.s32.totalorder %s124, %s138
    %p140 = scmp.eq.s32.totalorder %s18, 0
    %p141 = por %p139, %p140
    %s142 = ssub.s32 %s19, %s31
    %s143 = ssub.s32 %s20, %s27
    %s144 = sor.u32 %s142, %s143
    %p145 = scmp.eq.s32.totalorder %s144, 0
    %s147 = sadd.s32 %s146, 1
    %s148 = scalar_select %p145, %s146, %s147
    %p151 = pneg %p145
    %p152 = scmp.eq.s32.totalorder %s12, 1
    %p153 = por %p151, %p152
    %p154 = scmp.ne.s32.totalorder %s146, %s149
    %p155 = scmp.eq.s32.totalorder %s12, 0
    %p156 = por %p154, %p155
    %p157 = scmp.ne.s32.totalorder %s146, %s149
    %p158 = scmp.eq.s32.totalorder %s17, 1
    %p159 = por %p157, %p158
    %p160 = scmp.ne.s32.totalorder %s149, %s150
    %p161 = scmp.eq.s32.totalorder %s17, 0
    %p162 = por %p160, %p161
    %p163 = scmp.ne.s32.totalorder %s149, %s150
    %p164 = scmp.eq.s32.totalorder %s18, 1
    %p165 = por %p163, %p164
    %p167 = scmp.ne.s32.totalorder %s150, %s166
    %p168 = scmp.eq.s32.totalorder %s18, 0
    %p169 = por %p167, %p168
    %s170 = ssub.s32 %s19, %s31
    %s171 = ssub.s32 %s20, %s27
    %s172 = sor.u32 %s170, %s171
    %p173 = scmp.eq.s32.totalorder %s172, 0
    %s175 = sadd.s32 %s174, 1
    %s176 = scalar_select %p173, %s174, %s175
    %p179 = pneg %p173
    %p180 = scmp.eq.s32.totalorder %s12, 1
    %p181 = por %p179, %p180
    %p182 = scmp.ne.s32.totalorder %s174, %s177
    %p183 = scmp.eq.s32.totalorder %s12, 0
    %p184 = por %p182, %p183
    %p185 = scmp.ne.s32.totalorder %s174, %s177
    %p186 = scmp.eq.s32.totalorder %s17, 1
    %p187 = por %p185, %p186
    %p188 = scmp.ne.s32.totalorder %s177, %s178
    %p189 = scmp.eq.s32.totalorder %s17, 0
    %p190 = por %p188, %p189
    %p191 = scmp.ne.s32.totalorder %s177, %s178
    %p192 = scmp.eq.s32.totalorder %s18, 1
    %p193 = por %p191, %p192
    %p195 = scmp.ne.s32.totalorder %s178, %s194
    %p196 = scmp.eq.s32.totalorder %s18, 0
    %p197 = por %p195, %p196
    %p198 = scmp.le.s32.totalorder 1, %s12
    %p199 = scmp.lt.s32.totalorder %s12, 3
    %p200 = pnand %p198, %p199
    %p201 = pneg %p200
    // Predicated region
    $region9: #{to_rgb_forward.1} parent=5 // pred_check
      _
    $region10: #{to_rgb_forward.1} parent=5 // pred_check_branch
      %203 = sbr.rel (%p200) target = $region12
    $region11: #{to_rgb_forward.1} parent=5 // pred_region
      %s204 = ssub.s32 %s12, 1
      // Predicated region
      $region13: #{to_rgb_forward.1} parent=11 // pred_check
        %p205 = pneg %p71
      $region14: #{to_rgb_forward.1} parent=11 // pred_check_branch
        %207 = sbr.rel (%p205) target = $region16
      $region15: #{to_rgb_forward.1} parent=11 // pred_region
        _
      $region16: #{to_rgb_forward.1} parent=11 // pred_fallthru
        _
      // Predicated region
      $region17: #{to_rgb_forward.1} parent=11 // pred_check
        %p208 = pneg %p92
      $region18: #{to_rgb_forward.1} parent=11 // pred_check_branch
        %210 = sbr.rel (%p208) target = $region20
      $region19: #{to_rgb_forward.1} parent=11 // pred_region
        _
      $region20: #{to_rgb_forward.1} parent=11 // pred_fallthru
        _
      // Predicated region
      $region21: #{to_rgb_forward.1} parent=11 // pred_check
        %p211 = pneg %p113
      $region22: #{to_rgb_forward.1} parent=11 // pred_check_branch
        %213 = sbr.rel (%p211) target = $region24
      $region23: #{to_rgb_forward.1} parent=11 // pred_region
        _
      $region24: #{to_rgb_forward.1} parent=11 // pred_fallthru
        _
      // Predicated region
      $region25: #{to_rgb_forward.1} parent=11 // pred_check
        %p214 = pneg %p134
      $region26: #{to_rgb_forward.1} parent=11 // pred_check_branch
        %216 = sbr.rel (%p214) target = $region28
      $region27: #{to_rgb_forward.1} parent=11 // pred_region
        _
      $region28: #{to_rgb_forward.1} parent=11 // pred_fallthru
        _
    $region12: #{to_rgb_forward.1} parent=5 // pred_fallthru
      _
    %p217 = scmp.lt.s32.totalorder %s12, 2
    // Predicated region
    $region29: #{to_rgb_forward.1} parent=5 // pred_check
      %p218 = pneg %p217
    $region30: #{to_rgb_forward.1} parent=5 // pred_check_branch
      %220 = sbr.rel (%p218) target = $region32
    $region31: #{to_rgb_forward.1} parent=5 // pred_region
      // Predicated region
      $region33: #{to_rgb_forward.1} parent=31 // pred_check
        %p221 = pneg %p44
      $region34: #{to_rgb_forward.1} parent=31 // pred_check_branch
        %223 = sbr.rel (%p221) target = $region36
      $region35: #{to_rgb_forward.1} parent=31 // pred_region
        %p224 = scmp.lt.s32.totalorder %s19, 1
        %s225 = scalar_select %p224, %s19, 1
        %s226 = scalar_lea.vmem %s0, %s225
      $region36: #{to_rgb_forward.1} parent=31 // pred_fallthru
        _
      // Predicated region
      $region37: #{to_rgb_forward.1} parent=31 // pred_check
        %p227 = pneg %p156
      $region38: #{to_rgb_forward.1} parent=31 // pred_check_branch
        %229 = sbr.rel (%p227) target = $region40
      $region39: #{to_rgb_forward.1} parent=31 // pred_region
        %s230 = smul.u32 2, %s20
        %p231 = scmp.lt.s32.totalorder %s19, 1
        %s232 = scalar_select %p231, %s19, 1
        %p233 = scmp.lt.s32.totalorder %s230, 1
        %s234 = scalar_select %p233, %s230, 1
        %s235 = smul.addr %s232, 4
        %s236 = sadd.s32 %s234, %s235
        %s237 = smul.addr %s236, 8
        %s238 = scalar_lea.vmem %s5, %s237
        %s239 = smul.u32 2, %s20
      $region40: #{to_rgb_forward.1} parent=31 // pred_fallthru
        _
    $region32: #{to_rgb_forward.1} parent=5 // pred_fallthru
      _
    %p240 = scmp.le.s32.totalorder 1, %s12
    %p241 = scmp.lt.s32.totalorder %s12, 3
    %p242 = pnand %p240, %p241
    %p243 = pneg %p242
    // Predicated region
    $region41: #{to_rgb_forward.1} parent=5 // pred_check
      _
    $region42: #{to_rgb_forward.1} parent=5 // pred_check_branch
      %245 = sbr.rel (%p242) target = $region44
    $region43: #{to_rgb_forward.1} parent=5 // pred_region
      %s246 = ssub.s32 %s12, 1
      %p247 = scmp.lt.s32.totalorder %s21, 1
      %s248 = scalar_select %p247, %s21, 1
      %s249 = scalar_lea.vmem %s0, %s248
      %p250 = pneg %p50
      %p251 = pneg %p47
      %p252 = pneg %p71
      %p253 = pneg %p68
      %p254 = pneg %p92
      %p255 = pneg %p89
      %p256 = pneg %p113
      %p257 = pneg %p110
      %p258 = pneg %p134
      %p259 = pneg %p131
      %s260 = smul.u32 2, %s22
      %p261 = scmp.lt.s32.totalorder %s21, 1
      %s262 = scalar_select %p261, %s21, 1
      %p263 = scmp.lt.s32.totalorder %s260, 1
      %s264 = scalar_select %p263, %s260, 1
      %s265 = smul.addr %s262, 4
      %s266 = sadd.s32 %s264, %s265
      %s267 = smul.addr %s266, 8
      %s268 = scalar_lea.vmem %s5, %s267
      %p269 = pneg %p162
      %p270 = pneg %p159
      %p271 = pneg %p190
      %p272 = pneg %p187
      %s273 = smul.u32 2, %s22
      %p274 = scmp.lt.s32.totalorder %s21, 1
      %s275 = scalar_select %p274, %s21, 1
      %p276 = scmp.lt.s32.totalorder %s273, 1
      %s277 = scalar_select %p276, %s273, 1
      %s278 = smul.addr %s275, 2
      %s279 = sadd.s32 %s277, %s278
      %s280 = smul.addr %s279, 4
      %s281 = scalar_lea.vmem %s6, %s280
      %p282 = scmp.lt.s32.totalorder %s21, 1
      %s283 = scalar_select %p282, %s21, 1
      %s284 = scalar_lea.vmem %s0, %s283
      %s285 = smul.u32 2, %s22
      %p286 = scmp.lt.s32.totalorder %s21, 1
      %s287 = scalar_select %p286, %s21, 1
      %p288 = scmp.lt.s32.totalorder %s285, 1
      %s289 = scalar_select %p288, %s285, 1
      %s290 = smul.addr %s287, 4
      %s291 = sadd.s32 %s289, %s290
      %s292 = smul.addr %s291, 8
      %s293 = scalar_lea.vmem %s5, %s292
      %s294 = smul.u32 2, %s22
      %s295 = smul.u32 2, %s22
      %p296 = scmp.lt.s32.totalorder %s21, 1
      %s297 = scalar_select %p296, %s21, 1
      %p298 = scmp.lt.s32.totalorder %s295, 1
      %s299 = scalar_select %p298, %s295, 1
      %s300 = smul.addr %s297, 2
      %s301 = sadd.s32 %s299, %s300
      %s302 = smul.addr %s301, 4
      %s303 = scalar_lea.vmem %s6, %s302
      %s304 = smul.u32 2, %s22
      %v305 = vld [vmem:[%s284] sm:$0x1]
      %v306 = vld [vmem:[%s1] sm:$0xff]
      %v307 = vld [vmem:[%s1 + $0x8] sm:$0xff]
      %v308 = vld [vmem:[%s1 + $0x10] sm:$0xff]
      %v309 = vld [vmem:[%s1 + $0x18] sm:$0xff]
      %v310 = vld [vmem:[%s2] sm:$0x1]
      %vm311 = vcmask 261120
      %v313 = vsel %vm311, %v305, 0
      %315 = vmatprep.subr.mxu0 0.0
      %316 = vmatpush1.msra.mxu0 0.0
      %317 = vmatprep.subr.mxu0 0.0
      %318 = vmatpush1.msra.mxu0 0.0
      %319 = vmatprep.subr.mxu0 0.0
      %320 = vmatpush1.msra.mxu0 0.0
      %321 = vmatprep.subr.mxu0 0.0
      %322 = vmatpush1.msra.mxu0 0.0
      %323 = vmatprep.subr.mxu0 0.0
      %324 = vmatpush1.msra.mxu0 0.0
      %325 = vmatprep.subr.mxu0 0.0
      %326 = vmatpush1.msra.mxu0 0.0
      %327 = vmatprep.subr.mxu0 0.0
      %328 = vmatpush1.msra.mxu0 0.0
      %329 = vmatprep.subr.mxu0 0.0
      %330 = vmatpush1.msra.mxu0 0.0
      %331 = vmatprep.subr.mxu0 0.0
      %332 = vmatpush1.msra.mxu0 0.0
      %333 = vmatprep.subr.mxu0 0.0
      %334 = vmatpush1.msra.mxu0 0.0
      %335 = vmatprep.subr.mxu0 0.0
      %336 = vmatpush1.msra.mxu0 0.0
      %337 = vmatprep.subr.mxu0 0.0
      %338 = vmatpush1.msra.mxu0 0.0
      %339 = vmatprep.subr.mxu0 0.0
      %340 = vmatpush1.msra.mxu0 %v309
      %341 = vmatprep.subr.mxu0 0.0
      %342 = vmatpush1.msra.mxu0 %v308
      %343 = vmatprep.subr.mxu0 0.0
      %344 = vmatpush1.msra.mxu0 %v307
      %345 = vmatprep.subr.mxu0 0.0
      %346 = vmatpush1.msra.mxu0 %v306
      %347 = vmatprep.subr.mxu0 0.0
      %348 = vmatpush2.msra.mxu0 0.0
      %349 = vmatprep.subr.mxu0 0.0
      %350 = vmatpush2.msra.mxu0 0.0
      %351 = vmatprep.subr.mxu0 0.0
      %352 = vmatpush2.msra.mxu0 0.0
      %353 = vmatprep.subr.mxu0 0.0
      %354 = vmatpush2.msra.mxu0 0.0
      %355 = vmatprep.subr.mxu0 0.0
      %356 = vmatpush2.msra.mxu0 0.0
      %357 = vmatprep.subr.mxu0 0.0
      %358 = vmatpush2.msra.mxu0 0.0
      %359 = vmatprep.subr.mxu0 0.0
      %360 = vmatpush2.msra.mxu0 0.0
      %361 = vmatprep.subr.mxu0 0.0
      %362 = vmatpush2.msra.mxu0 0.0
      %363 = vmatprep.subr.mxu0 0.0
      %364 = vmatpush2.msra.mxu0 0.0
      %365 = vmatprep.subr.mxu0 0.0
      %366 = vmatpush2.msra.mxu0 0.0
      %367 = vmatprep.subr.mxu0 0.0
      %368 = vmatpush2.msra.mxu0 0.0
      %369 = vmatprep.subr.mxu0 0.0
      %370 = vmatpush2.msra.mxu0 0.0
      %371 = vmatprep.subr.mxu0 0.0
      %372 = vmatpush2.msra.mxu0 0.0
      %373 = vmatprep.subr.mxu0 0.0
      %374 = vmatpush2.msra.mxu0 0.0
      %375 = vmatprep.subr.mxu0 0.0
      %376 = vmatpush2.msra.mxu0 0.0
      %377 = vmatprep.subr.mxu0 0.0
      %378 = vmatpush2.msra.mxu0 0.0
      %379 = vmatprep.mubr.f32.mxu0 0.0
      %380 = vmatmul.mubr.f32.gmra.mxu0 %v313
      %v381 = vpop.f32.mrf.mxu0
      %v382 = vadd.f32 %v310, %v381
      %v383 = vpop.f32.mrf.mxu0
      %384 = vdwg.mxu0
      %v385 = vld [vmem:[%s3] sm:$0x7]
      %v386 = vlaneseq
      %v387 = vshrl.u32 %v386, 7
      %v388 = vsub.s32 0, %v387
      %v389 = vrot.slane %v382, %v388
      %v390 = vmul.f32 %v385, %v389
      %v391 = vld [vmem:[%s293] sm:$0xff]
      %v392 = vld [vmem:[%s293 + $0x8] sm:$0xff]
      %v393 = vld [vmem:[%s293 + $0x10] sm:$0xff]
      %v394 = vld [vmem:[%s293 + $0x18] sm:$0xff]
      %v395 = vld [vmem:[%s4] sm:$0x7]
      %397 = vset.pattern.permute.xlu0 0
      %398 = vperm.xlu0 %397, %v395
      %v399 = vpop.permute.xlu0 %398
      %vm401 = vcmask 130048
      %v403 = vsel %vm401, %v390, 0
      %405 = vmatprep.subr.mxu0 0.0
      %406 = vmatpush1.msra.mxu0 0.0
      %407 = vmatprep.subr.mxu0 0.0
      %408 = vmatpush1.msra.mxu0 0.0
      %409 = vmatprep.subr.mxu0 0.0
      %410 = vmatpush1.msra.mxu0 0.0
      %411 = vmatprep.subr.mxu0 0.0
      %412 = vmatpush1.msra.mxu0 0.0
      %413 = vmatprep.subr.mxu0 0.0
      %414 = vmatpush1.msra.mxu0 0.0
      %415 = vmatprep.subr.mxu0 0.0
      %416 = vmatpush1.msra.mxu0 0.0
      %417 = vmatprep.subr.mxu0 0.0
      %418 = vmatpush1.msra.mxu0 0.0
      %419 = vmatprep.subr.mxu0 0.0
      %420 = vmatpush1.msra.mxu0 0.0
      %421 = vmatprep.subr.mxu0 0.0
      %422 = vmatpush1.msra.mxu0 0.0
      %423 = vmatprep.subr.mxu0 0.0
      %424 = vmatpush1.msra.mxu0 0.0
      %425 = vmatprep.subr.mxu0 0.0
      %426 = vmatpush1.msra.mxu0 0.0
      %427 = vmatprep.subr.mxu0 0.0
      %428 = vmatpush1.msra.mxu0 0.0
      %429 = vmatprep.subr.mxu0 0.0
      %430 = vmatpush1.msra.mxu0 0.0
      %431 = vmatprep.subr.mxu0 0.0
      %432 = vmatpush1.msra.mxu0 0.0
      %433 = vmatprep.subr.mxu0 %v394
      %434 = vmatpush1.msra.mxu0 %v393
      %435 = vmatprep.subr.mxu0 %v392
      %436 = vmatpush1.msra.mxu0 %v391
      %437 = vmatprep.subr.mxu0 0.0
      %438 = vmatpush2.msra.mxu0 0.0
      %439 = vmatprep.subr.mxu0 0.0
      %440 = vmatpush2.msra.mxu0 0.0
      %441 = vmatprep.subr.mxu0 0.0
      %442 = vmatpush2.msra.mxu0 0.0
      %443 = vmatprep.subr.mxu0 0.0
      %444 = vmatpush2.msra.mxu0 0.0
      %445 = vmatprep.subr.mxu0 0.0
      %446 = vmatpush2.msra.mxu0 0.0
      %447 = vmatprep.subr.mxu0 0.0
      %448 = vmatpush2.msra.mxu0 0.0
      %449 = vmatprep.subr.mxu0 0.0
      %450 = vmatpush2.msra.mxu0 0.0
      %451 = vmatprep.subr.mxu0 0.0
      %452 = vmatpush2.msra.mxu0 0.0
      %453 = vmatprep.subr.mxu0 0.0
      %454 = vmatpush2.msra.mxu0 0.0
      %455 = vmatprep.subr.mxu0 0.0
      %456 = vmatpush2.msra.mxu0 0.0
      %457 = vmatprep.subr.mxu0 0.0
      %458 = vmatpush2.msra.mxu0 0.0
      %459 = vmatprep.subr.mxu0 0.0
      %460 = vmatpush2.msra.mxu0 0.0
      %461 = vmatprep.subr.mxu0 0.0
      %462 = vmatpush2.msra.mxu0 0.0
      %463 = vmatprep.subr.mxu0 0.0
      %464 = vmatpush2.msra.mxu0 0.0
      %465 = vmatprep.subr.mxu0 0.0
      %466 = vmatpush2.msra.mxu0 0.0
      %467 = vmatprep.subr.mxu0 0.0
      %468 = vmatpush2.msra.mxu0 0.0
      %469 = vmatprep.mubr.f32.mxu0 0.0
      %470 = vmatmul.mubr.f32.gmra.mxu0 %v403
      %v471 = vpop.f32.mrf.mxu0
      %v472 = vadd.f32 %v399, %v471
      %v473 = vpop.f32.mrf.mxu0
      %v474 = vadd.f32 %v399, %v473
      %475 = vdwg.mxu0
      %vm476 = vcmp.ge.f32.partialorder %v472, 0.0
      %vm477 = vcmp.ge.f32.partialorder %v474, 0.0
      %v478 = vmul.f32 %v472, 0.2
      %v479 = vmul.f32 %v474, 0.2
      %v480 = vsel %vm476, %v472, %v478
      %v481 = vsel %vm477, %v474, %v479
      %v484 = vcombine.low %v480, %v481
      %486 = vst [vmem:[%s303] sm:$0x77] %v484
      %s487 = smul.u32 2, %s22
      %p488 = scmp.lt.s32.totalorder %s21, 1
      %s489 = scalar_select %p488, %s21, 1
      %p490 = scmp.lt.s32.totalorder %s487, 1
      %s491 = scalar_select %p490, %s487, 1
      %s492 = smul.addr %s489, 2
      %s493 = sadd.s32 %s491, %s492
      %s494 = smul.addr %s493, 4
      %s495 = scalar_lea.vmem %s6, %s494
      // Predicated region
      $region45: #{to_rgb_forward.1} parent=43 // pred_check
        %p496 = pneg %p187
      $region46: #{to_rgb_forward.1} parent=43 // pred_check_branch
        %498 = sbr.rel (%p496) target = $region48
      $region47: #{to_rgb_forward.1} parent=43 // pred_region
        %s499 = smul.u32 2, %s22
      $region48: #{to_rgb_forward.1} parent=43 // pred_fallthru
        _
    $region44: #{to_rgb_forward.1} parent=5 // pred_fallthru
      _
    %p500 = scmp.le.s32.totalorder 2, %s12
    // Predicated region
    $region49: #{to_rgb_forward.1} parent=5 // pred_check
      %p501 = pneg %p500
    $region50: #{to_rgb_forward.1} parent=5 // pred_check_branch
      %503 = sbr.rel (%p501) target = $region52
    $region51: #{to_rgb_forward.1} parent=5 // pred_region
      %s504 = ssub.s32 %s12, 2
      // Predicated region
      $region53: #{to_rgb_forward.1} parent=51 // pred_check
        %p505 = pneg %p193
      $region54: #{to_rgb_forward.1} parent=51 // pred_check_branch
        %507 = sbr.rel (%p505) target = $region56
      $region55: #{to_rgb_forward.1} parent=51 // pred_region
        %s508 = smul.u32 2, %s24
        %p509 = scmp.lt.s32.totalorder %s23, 1
        %s510 = scalar_select %p509, %s23, 1
        %p511 = scmp.lt.s32.totalorder %s508, 1
        %s512 = scalar_select %p511, %s508, 1
        %s513 = smul.addr %s510, 2
        %s514 = sadd.s32 %s512, %s513
        %s515 = smul.addr %s514, 4
        %s516 = scalar_lea.vmem %s6, %s515
      $region56: #{to_rgb_forward.1} parent=51 // pred_fallthru
        _
    $region52: #{to_rgb_forward.1} parent=5 // pred_fallthru
      _
  $region6: #{to_rgb_forward.1} parent=0 // loop_footer
    %s16 = sadd.s32 1, %s12
  $region7: #{to_rgb_forward.1} parent=0 // loop_footer_branch
    %11 = sbr.rel target = $region3
  $region8: #{to_rgb_forward.1} parent=0 // loop_exit
    _

</llo_original>
